<compile_context>
chip_gen: v7x
topology: tpu7x:2x2x1
jax: 0.10.0
libtpu: 0.0.40
codegen_flags: <defaults>
</compile_context>

<pallas_src>
import jax
import jax.numpy as jnp
from jax.experimental import pallas as pl
from jax.experimental.pallas import tpu as pltpu


# --------------------------------------------------------------------------
# parameter setup (plain JAX, mirrors the module's __init__ shapes)
# --------------------------------------------------------------------------
def init_params(key, n_components, det_kernel=5, n_mid_channels=4,
                n_mid_layers=2, slen=16):
    params = []
    chans = [1] + [n_mid_channels] * (n_mid_layers + 1) + [1]
    for _ in range(n_components):
        comp = {}
        det = []
        for l in range(len(chans) - 1):
            key, kw, kb = jax.random.split(key, 3)
            w = jax.random.normal(kw, (chans[l + 1], chans[l], det_kernel),
                                  jnp.float32) * 0.3
            b = jax.random.normal(kb, (chans[l + 1],), jnp.float32) * 0.1 + 0.05
            det.append((w, b))
        comp['det'] = det
        key, kw, kb, ka = jax.random.split(key, 4)
        comp['lin_w'] = jax.random.normal(kw, (1, slen), jnp.float32) * 0.3
        comp['lin_b'] = jax.random.normal(kb, (1,), jnp.float32) * 0.1 + 0.05
        comp['atom_w'] = jax.random.normal(ka, (1, 1, slen), jnp.float32)
        params.append(comp)
    return params


def conv_to_matrix(w, T):
    """Lower Conv1d(C_in, C_out, K, padding='same') to a [C_in*T, C_out*T] matrix.

    out_flat[b, o*T + t] = sum_{i,s} x_flat[b, i*T + s] * M[i*T + s, o*T + t]
    with M[(i,s),(o,t)] = w[o, i, s - t + K//2] where that tap index is valid.
    """
    C_out, C_in, K = w.shape
    assert K % 2 == 1, "padding='same' lowering here assumes an odd kernel size"
    P = K // 2
    s = jnp.arange(T)[:, None]          # input time
    t = jnp.arange(T)[None, :]          # output time
    k = s - t + P                       # [T, T] tap index
    valid = (k >= 0) & (k < K)
    k_c = jnp.clip(k, 0, K - 1)
    gathered = w[:, :, k_c]             # [C_out, C_in, T, T]
    M = jnp.where(valid[None, None], gathered, 0.0)
    M = jnp.transpose(M, (1, 2, 0, 3))  # [C_in, T(s), C_out, T(t)]
    return M.reshape(C_in * T, C_out * T).astype(jnp.float32)


def build_fused_params(params, T):
    """Fuse all components' weights into 5 matmul operands. CALL ONCE (hoisted).

    Biases are folded in via an augmented ones column: the kernel carries
    h_aug = [h | 1]; each layer matrix has an extra bias row and a [0..0,1]
    column so the ones lane propagates through ReLU (ReLU(1)=1).
    """
    block_diag = jax.scipy.linalg.block_diag
    NC = len(params)
    n_det = len(params[0]['det'])            # n_mid_layers + 2
    assert n_det >= 3, "expect at least one mid layer (n_mid_layers >= 1)"
    C_mid = params[0]['det'][0][0].shape[0]  # n_mid_channels
    D = NC * C_mid * T                       # fused mid width
    NCT = NC * T

    def bias_row(l):
        return jnp.concatenate([jnp.repeat(p['det'][l][1], T) for p in params])

    # Layer 0: input x is shared across components -> concat along lanes.
    M0 = jnp.concatenate([conv_to_matrix(p['det'][0][0], T) for p in params], axis=1)  # [T, D]
    A0 = jnp.zeros((T + 1, D + 1), jnp.float32)
    A0 = A0.at[:T, :D].set(M0).at[T, :D].set(bias_row(0)).at[T, D].set(1.0)

    # Mid layers: independent per component -> block-diagonal; stack into one slab.
    mids = []
    for l in range(1, n_det - 1):
        Ml = block_diag(*[conv_to_matrix(p['det'][l][0], T) for p in params])  # [D, D]
        Al = jnp.zeros((D + 1, D + 1), jnp.float32)
        Al = Al.at[:D, :D].set(Ml).at[D, :D].set(bias_row(l)).at[D, D].set(1.0)
        mids.append(Al)
    A_mid = jnp.stack(mids)                                                    # [n_mid, D+1, D+1]

    # Last detector layer (C_mid -> 1 channel per component).
    ML = block_diag(*[conv_to_matrix(p['det'][n_det - 1][0], T) for p in params])  # [D, NCT]
    A3 = jnp.zeros((D + 1, NCT + 1), jnp.float32)
    A3 = A3.at[:D, :NCT].set(ML).at[D, :NCT].set(bias_row(n_det - 1)).at[D, NCT].set(1.0)

    # Linear(slen, 1) head with its bias folded as the last row.
    WH = block_diag(*[p['lin_w'].reshape(T, 1) for p in params])               # [NCT, NC]
    bH = jnp.concatenate([p['lin_b'] for p in params])                         # [NC]
    AH = jnp.zeros((NCT + 1, NC), jnp.float32)
    AH = AH.at[:NCT, :].set(WH).at[NCT, :].set(bH)

    # Atom Conv1d(1,1,slen,pad=slen-1,no bias) on a length-1 input == v * flipped kernel.
    AA = block_diag(*[p['atom_w'][0, 0][::-1][None, :] for p in params]).astype(jnp.float32)  # [NC, NCT]

    return A0, A_mid, A3, AH, AA


# --------------------------------------------------------------------------
# Pallas kernel: single invocation, all components fused, 6 operands total.
# --------------------------------------------------------------------------
def _fused_kernel(x_ref, a0_ref, amid_ref, a3_ref, ah_ref, aa_ref, out_ref):
    # x_ref: [B, T+1]  (ones lane appended by the wrapper)
    h = x_ref[...]
    # Detector layer 0 (Conv1d 'same' + bias + ReLU for all components at once).
    h = jnp.maximum(jnp.dot(h, a0_ref[...], preferred_element_type=jnp.float32), 0.0)
    # Mid detector layers: one wide block-diagonal matmul each (static unroll).
    for l in range(amid_ref.shape[0]):
        h = jnp.maximum(jnp.dot(h, amid_ref[l], preferred_element_type=jnp.float32), 0.0)
    # Final detector layer (C_mid -> 1 channel per component).
    h = jnp.maximum(jnp.dot(h, a3_ref[...], preferred_element_type=jnp.float32), 0.0)
    # Linear(slen, 1) + bias + ReLU (bias folded into last row of AH).
    v = jnp.maximum(jnp.dot(h, ah_ref[...], preferred_element_type=jnp.float32), 0.0)
    # Atom conv on a length-1 input == scalar * flipped kernel (block-diag matmul).
    out_ref[...] = jnp.dot(v, aa_ref[...], preferred_element_type=jnp.float32)


@jax.jit
def decomposer_time_locked_forward(x, fused):
    """Per-call forward: one tiny concat + one pallas_call. Weights are pre-fused."""
    A0, A_mid, A3, AH, AA = fused
    B, T = x.shape
    NC, NCT = AA.shape
    # Append the ones lane that carries the folded biases through the layers.
    x_aug = jnp.concatenate([x.astype(jnp.float32), jnp.ones((B, 1), jnp.float32)], axis=-1)

    vmem = pl.BlockSpec(memory_space=pltpu.MemorySpace.VMEM)
    out = pl.pallas_call(
        _fused_kernel,
        out_shape=jax.ShapeDtypeStruct((B, NCT), jnp.float32),
        in_specs=[vmem] * 6,
        out_specs=vmem,
    )(x_aug, A0, A_mid, A3, AH, AA)

    # NOTE: once B grows (>~256 rows) the right extension is a batch grid axis
    # (block multiple of 8 rows, weights kept at constant index_maps, and
    # dimension_semantics=("parallel",) to shard across v7x's 2 TensorCores).
    # At B=2 the kernel is launch-bound and a grid only adds overhead.
    return out.reshape(B, NC, T)


# --------------------------------------------------------------------------
# pure-JAX reference (mirrors the PyTorch forward directly)
# --------------------------------------------------------------------------
def _conv1d_same_ref(x, w, b):
    Bb, C_in, T = x.shape
    C_out, _, K = w.shape
    P = K // 2
    xp = jnp.pad(x, ((0, 0), (0, 0), (P, P)))
    out = jnp.zeros((Bb, C_out, T), jnp.float32)
    for k in range(K):
        out = out + jnp.einsum('oi,bit->bot', w[:, :, k], xp[:, :, k:k + T])
    return out + b[None, :, None]


def ref_forward(x, params):
    Bb, T = x.shape
    outs = []
    for p in params:
        h = x[:, None, :]
        for (w, b) in p['det']:
            h = jax.nn.relu(_conv1d_same_ref(h, w, b))
        h = h.reshape(Bb, -1)                               # [B, T]
        v = jax.nn.relu(h @ p['lin_w'].T + p['lin_b'])      # [B, 1]
        out_c = v * p['atom_w'][0, 0][::-1][None, :]        # [B, T]
        outs.append(out_c)
    return jnp.stack(outs, axis=1)


# --------------------------------------------------------------------------
if __name__ == "__main__":
    B = 2
    slen = 16            # atom kernel size == sequence length (forced by Linear(slen, 1))
    n_components = 3

    x = jax.random.normal(jax.random.PRNGKey(0), (B, slen), jnp.float32)
    params = init_params(jax.random.PRNGKey(42), n_components,
                         det_kernel=5, n_mid_channels=4, n_mid_layers=2,
                         slen=slen)

    # HOISTED: fuse the weights exactly once (never inside the per-call forward).
    fused = build_fused_params(params, slen)
    fused = jax.tree_util.tree_map(jax.block_until_ready, fused)

    out = decomposer_time_locked_forward(x, fused)
    out = jax.block_until_ready(out)

    ref = ref_forward(x, params)
    assert out.shape == (B, n_components, slen)
    assert jnp.allclose(out, ref, rtol=1e-4, atol=1e-4), "kernel/reference mismatch"
    print("KERNEL_OK")
</pallas_src>

<mosaic_0001>
module attributes {stable_mosaic.version = 11 : i64} {
  func.func @_fused_kernel(%arg0: memref<2x17xf32, #tpu.memory_space<vmem>>, %arg1: memref<17x193xf32, #tpu.memory_space<vmem>>, %arg2: memref<2x193x193xf32, #tpu.memory_space<vmem>>, %arg3: memref<193x49xf32, #tpu.memory_space<vmem>>, %arg4: memref<49x3xf32, #tpu.memory_space<vmem>>, %arg5: memref<3x48xf32, #tpu.memory_space<vmem>>, %arg6: memref<2x48xf32, #tpu.memory_space<vmem>>) attributes {dimension_semantics = [], scalar_prefetch = 0 : i64, scratch_operands = 0 : i64, tpu.core_type = #tpu.core_type<tc>} {
    %c0 = arith.constant 0 : index
    %c0_0 = arith.constant 0 : index
    %0 = vector.load %arg0[%c0, %c0_0] : memref<2x17xf32, #tpu.memory_space<vmem>>, vector<2x17xf32>
    %c0_1 = arith.constant 0 : index
    %c0_2 = arith.constant 0 : index
    %1 = vector.load %arg1[%c0_1, %c0_2] : memref<17x193xf32, #tpu.memory_space<vmem>>, vector<17x193xf32>
    %cst = arith.constant dense<0.000000e+00> : vector<2x193xf32>
    %2 = tpu.matmul %0, %1, %cst {dimension_numbers = #tpu.dot_dimension_numbers<[1], [0], [0], [1], [0, 0, 1, 1], [], []>} : vector<2x17xf32>, vector<17x193xf32>, vector<2x193xf32> -> vector<2x193xf32>
    %cst_3 = arith.constant 0.000000e+00 : f32
    %3 = vector.broadcast %cst_3 : f32 to vector<2x193xf32>
    %4 = arith.maximumf %2, %3 : vector<2x193xf32>
    %c0_4 = arith.constant 0 : index
    %c0_5 = arith.constant 0 : index
    %c0_6 = arith.constant 0 : index
    %5 = vector.load %arg2[%c0_4, %c0_5, %c0_6] : memref<2x193x193xf32, #tpu.memory_space<vmem>>, vector<1x193x193xf32>
    %6 = vector.shape_cast %5 : vector<1x193x193xf32> to vector<193x193xf32>
    %cst_7 = arith.constant dense<0.000000e+00> : vector<2x193xf32>
    %7 = tpu.matmul %4, %6, %cst_7 {dimension_numbers = #tpu.dot_dimension_numbers<[1], [0], [0], [1], [0, 0, 1, 1], [], []>} : vector<2x193xf32>, vector<193x193xf32>, vector<2x193xf32> -> vector<2x193xf32>
    %cst_8 = arith.constant 0.000000e+00 : f32
    %8 = vector.broadcast %cst_8 : f32 to vector<2x193xf32>
    %9 = arith.maximumf %7, %8 : vector<2x193xf32>
    %c1 = arith.constant 1 : index
    %c0_9 = arith.constant 0 : index
    %c0_10 = arith.constant 0 : index
    %10 = vector.load %arg2[%c1, %c0_9, %c0_10] : memref<2x193x193xf32, #tpu.memory_space<vmem>>, vector<1x193x193xf32>
    %11 = vector.shape_cast %10 : vector<1x193x193xf32> to vector<193x193xf32>
    %cst_11 = arith.constant dense<0.000000e+00> : vector<2x193xf32>
    %12 = tpu.matmul %9, %11, %cst_11 {dimension_numbers = #tpu.dot_dimension_numbers<[1], [0], [0], [1], [0, 0, 1, 1], [], []>} : vector<2x193xf32>, vector<193x193xf32>, vector<2x193xf32> -> vector<2x193xf32>
    %cst_12 = arith.constant 0.000000e+00 : f32
    %13 = vector.broadcast %cst_12 : f32 to vector<2x193xf32>
    %14 = arith.maximumf %12, %13 : vector<2x193xf32>
    %c0_13 = arith.constant 0 : index
    %c0_14 = arith.constant 0 : index
    %15 = vector.load %arg3[%c0_13, %c0_14] : memref<193x49xf32, #tpu.memory_space<vmem>>, vector<193x49xf32>
    %cst_15 = arith.constant dense<0.000000e+00> : vector<2x49xf32>
    %16 = tpu.matmul %14, %15, %cst_15 {dimension_numbers = #tpu.dot_dimension_numbers<[1], [0], [0], [1], [0, 0, 1, 1], [], []>} : vector<2x193xf32>, vector<193x49xf32>, vector<2x49xf32> -> vector<2x49xf32>
    %cst_16 = arith.constant 0.000000e+00 : f32
    %17 = vector.broadcast %cst_16 : f32 to vector<2x49xf32>
    %18 = arith.maximumf %16, %17 : vector<2x49xf32>
    %c0_17 = arith.constant 0 : index
    %c0_18 = arith.constant 0 : index
    %19 = vector.load %arg4[%c0_17, %c0_18] : memref<49x3xf32, #tpu.memory_space<vmem>>, vector<49x3xf32>
    %cst_19 = arith.constant dense<0.000000e+00> : vector<2x3xf32>
    %20 = tpu.matmul %18, %19, %cst_19 {dimension_numbers = #tpu.dot_dimension_numbers<[1], [0], [0], [1], [0, 0, 1, 1], [], []>} : vector<2x49xf32>, vector<49x3xf32>, vector<2x3xf32> -> vector<2x3xf32>
    %cst_20 = arith.constant 0.000000e+00 : f32
    %21 = vector.broadcast %cst_20 : f32 to vector<2x3xf32>
    %22 = arith.maximumf %20, %21 : vector<2x3xf32>
    %c0_21 = arith.constant 0 : index
    %c0_22 = arith.constant 0 : index
    %23 = vector.load %arg5[%c0_21, %c0_22] : memref<3x48xf32, #tpu.memory_space<vmem>>, vector<3x48xf32>
    %cst_23 = arith.constant dense<0.000000e+00> : vector<2x48xf32>
    %24 = tpu.matmul %22, %23, %cst_23 {dimension_numbers = #tpu.dot_dimension_numbers<[1], [0], [0], [1], [0, 0, 1, 1], [], []>} : vector<2x3xf32>, vector<3x48xf32>, vector<2x48xf32> -> vector<2x48xf32>
    %c0_24 = arith.constant 0 : index
    %c0_25 = arith.constant 0 : index
    %25 = vector.load %arg6[%c0_24, %c0_25] : memref<2x48xf32, #tpu.memory_space<vmem>>, vector<2x48xf32>
    tpu.vector_store %arg6[%c0_24, %c0_25], %24 {strides = array<i32>} : memref<2x48xf32, #tpu.memory_space<vmem>>, vector<2x48xf32>,
    return
  }
}

</mosaic_0001>

<llo_original>
// kernel: decomposer_time_locked_forward.1
$region0: #{decomposer_time_locked_forward.1}
  #allocation0 [shape = 'u32[]', space=smem, size = 0x4, offset = 0x4, fixed_abs, tag = 'smem constant byte address 0x4 - core index']
  #allocation1 [shape = 'u32[144,128]{1,0:T(1,128)}', space=vmem, size = 0x12000, scoped, tag = 'internal scratch']
  %s0 = inlined_call_operand.vmem [shape: f32[2,17], index: 0, kind: input, shape index: {}]
  %s1 = inlined_call_operand.vmem [shape: f32[17,193], index: 1, kind: input, shape index: {}]
  %s2 = inlined_call_operand.vmem [shape: f32[2,193,193], index: 2, kind: input, shape index: {}]
  %s3 = inlined_call_operand.vmem [shape: f32[193,49], index: 3, kind: input, shape index: {}]
  %s4 = inlined_call_operand.vmem [shape: f32[49,3], index: 4, kind: input, shape index: {}]
  %s5 = inlined_call_operand.vmem [shape: f32[3,48], index: 5, kind: input, shape index: {}]
  %s6 = inlined_call_operand.vmem [shape: f32[2,48], index: 6, kind: output, shape index: {}]
  %s7 = sld [smem:[#allocation0]]
  $region34: #{decomposer_time_locked_forward.1} parent=0
    _
  %s9 = ssub.s32 1, %s7
  %s10 = scalar_select 0, %s9, %s7
  // Predicated region
  $region2: #{decomposer_time_locked_forward.1} parent=0 // pred_check
    _
  $region3: #{decomposer_time_locked_forward.1} parent=0 // pred_check_branch
    %12 = sbr.rel (0) target = $region5
  $region4: #{decomposer_time_locked_forward.1} parent=0 // pred_region
    _
  $region5: #{decomposer_time_locked_forward.1} parent=0 // pred_fallthru
    _
  // Predicated region
  $region6: #{decomposer_time_locked_forward.1} parent=0 // pred_check
    _
  $region7: #{decomposer_time_locked_forward.1} parent=0 // pred_check_branch
    %14 = sbr.rel (0) target = $region9
  $region8: #{decomposer_time_locked_forward.1} parent=0 // pred_region
    _
  $region9: #{decomposer_time_locked_forward.1} parent=0 // pred_fallthru
    _
  // Predicated region
  $region10: #{decomposer_time_locked_forward.1} parent=0 // pred_check
    _
  $region11: #{decomposer_time_locked_forward.1} parent=0 // pred_check_branch
    %16 = sbr.rel (0) target = $region13
  $region12: #{decomposer_time_locked_forward.1} parent=0 // pred_region
    _
  $region13: #{decomposer_time_locked_forward.1} parent=0 // pred_fallthru
    _
  // Predicated region
  $region14: #{decomposer_time_locked_forward.1} parent=0 // pred_check
    _
  $region15: #{decomposer_time_locked_forward.1} parent=0 // pred_check_branch
    %18 = sbr.rel (0) target = $region17
  $region16: #{decomposer_time_locked_forward.1} parent=0 // pred_region
    _
  $region17: #{decomposer_time_locked_forward.1} parent=0 // pred_fallthru
    _
  // Predicated region
  $region18: #{decomposer_time_locked_forward.1} parent=0 // pred_check
    _
  $region19: #{decomposer_time_locked_forward.1} parent=0 // pred_check_branch
    %20 = sbr.rel (0) target = $region21
  $region20: #{decomposer_time_locked_forward.1} parent=0 // pred_region
    _
  $region21: #{decomposer_time_locked_forward.1} parent=0 // pred_fallthru
    _
  // Predicated region
  $region22: #{decomposer_time_locked_forward.1} parent=0 // pred_check
    _
  $region23: #{decomposer_time_locked_forward.1} parent=0 // pred_check_branch
    %22 = sbr.rel (0) target = $region25
  $region24: #{decomposer_time_locked_forward.1} parent=0 // pred_region
    _
  $region25: #{decomposer_time_locked_forward.1} parent=0 // pred_fallthru
    _
  %v23 = vld [vmem:[%s0] sm:$0x3]
  %v24 = vld [vmem:[%s1] sm:$0xff]
  %v25 = vld [vmem:[%s1 + $0x8] sm:$0xff]
  %v26 = vld [vmem:[%s1 + $0x10] sm:$0xff]
  %v27 = vld [vmem:[%s1 + $0x18] sm:$0xff]
  %v28 = vld [vmem:[%s1 + $0x20] sm:$0x1]
  %v29 = vld [vmem:[%s1 + $0x28] sm:$0x1]
  %vm30 = vcmask 138240
  %v32 = vsel %vm30, %v23, 0
  %vm34 = vcmask 1040384
  %v36 = vsel %vm34, %v28, 0
  %v39 = vsel %vm34, %v29, 0
  %41 = vmatprep.subr.mxu0 %v25
  %42 = vmatpush1.msra.mxu0 %v24
  %43 = vmatprep.subr.mxu0 %v27
  %44 = vmatpush1.msra.mxu0 %v26
  %45 = vmatprep.subr.mxu0 %v39
  %46 = vmatpush1.msra.mxu0 %v36
  %47 = vmatprep.subr.mxu0 0.0
  %48 = vmatpush1.msra.mxu0 0.0
  %49 = vmatprep.subr.mxu0 0.0
  %50 = vmatpush1.msra.mxu0 0.0
  %51 = vmatprep.subr.mxu0 0.0
  %52 = vmatpush1.msra.mxu0 0.0
  %53 = vmatprep.subr.mxu0 0.0
  %54 = vmatpush1.msra.mxu0 0.0
  %55 = vmatprep.subr.mxu0 0.0
  %56 = vmatpush1.msra.mxu0 0.0
  %57 = vmatprep.subr.mxu0 0.0
  %58 = vmatpush1.msra.mxu0 0.0
  %59 = vmatprep.subr.mxu0 0.0
  %60 = vmatpush1.msra.mxu0 0.0
  %61 = vmatprep.subr.mxu0 0.0
  %62 = vmatpush1.msra.mxu0 0.0
  %63 = vmatprep.subr.mxu0 0.0
  %64 = vmatpush1.msra.mxu0 0.0
  %65 = vmatprep.subr.mxu0 0.0
  %66 = vmatpush1.msra.mxu0 0.0
  %67 = vmatprep.subr.mxu0 0.0
  %68 = vmatpush1.msra.mxu0 0.0
  %69 = vmatprep.subr.mxu0 0.0
  %70 = vmatpush1.msra.mxu0 0.0
  %71 = vmatprep.subr.mxu0 0.0
  %72 = vmatpush1.msra.mxu0 0.0
  %73 = vmatprep.subr.mxu0 0.0
  %74 = vmatpush1.msra.mxu0 0.0
  %75 = vmatprep.subr.mxu0 0.0
  %76 = vmatpush1.msra.mxu0 0.0
  %77 = vmatprep.subr.mxu0 0.0
  %78 = vmatpush1.msra.mxu0 0.0
  %79 = vmatprep.subr.mxu0 0.0
  %80 = vmatpush1.msra.mxu0 0.0
  %81 = vmatprep.subr.mxu0 0.0
  %82 = vmatpush1.msra.mxu0 0.0
  %83 = vmatprep.subr.mxu0 0.0
  %84 = vmatpush1.msra.mxu0 0.0
  %85 = vmatprep.subr.mxu0 0.0
  %86 = vmatpush1.msra.mxu0 0.0
  %87 = vmatprep.subr.mxu0 0.0
  %88 = vmatpush1.msra.mxu0 0.0
  %89 = vmatprep.subr.mxu0 0.0
  %90 = vmatpush1.msra.mxu0 0.0
  %91 = vmatprep.subr.mxu0 0.0
  %92 = vmatpush1.msra.mxu0 0.0
  %93 = vmatprep.subr.mxu0 0.0
  %94 = vmatpush1.msra.mxu0 0.0
  %95 = vmatprep.subr.mxu0 0.0
  %96 = vmatpush1.msra.mxu0 0.0
  %97 = vmatprep.subr.mxu0 0.0
  %98 = vmatpush1.msra.mxu0 0.0
  %99 = vmatprep.subr.mxu0 0.0
  %100 = vmatpush1.msra.mxu0 0.0
  %101 = vmatprep.subr.mxu0 0.0
  %102 = vmatpush1.msra.mxu0 0.0
  %103 = vmatprep.subr.mxu0 0.0
  %104 = vmatpush1.msra.mxu0 0.0
  %105 = vmatprep.mubr.f32.mxu0 0.0
  %106 = vmatmul.mubr.f32.gmra.mrb[0].mxu0 %v32
  %v107 = vpop.f32.mrb[0].mxu0
  %v108 = vadd.f32 0.0, %v107
  %v109 = vpop.f32.mrb[0].mxu0
  %v110 = vadd.f32 0.0, %v109
  %111 = vdwg.mxu0
  %v112 = vmax.f32 %v108, 0.0
  %v113 = vmax.f32 %v110, 0.0
  %v114 = vld [vmem:[%s2] sm:$0xff]
  %v115 = vld [vmem:[%s2 + $0x8] sm:$0xff]
  %v116 = vld [vmem:[%s2 + $0x10] sm:$0xff]
  %v117 = vld [vmem:[%s2 + $0x18] sm:$0xff]
  %v118 = vld [vmem:[%s2 + $0x20] sm:$0xff]
  %v119 = vld [vmem:[%s2 + $0x28] sm:$0xff]
  %v120 = vld [vmem:[%s2 + $0x30] sm:$0xff]
  %v121 = vld [vmem:[%s2 + $0x38] sm:$0xff]
  %v122 = vld [vmem:[%s2 + $0x40] sm:$0xff]
  %v123 = vld [vmem:[%s2 + $0x48] sm:$0xff]
  %v124 = vld [vmem:[%s2 + $0x50] sm:$0xff]
  %v125 = vld [vmem:[%s2 + $0x58] sm:$0xff]
  %v126 = vld [vmem:[%s2 + $0x60] sm:$0xff]
  %v127 = vld [vmem:[%s2 + $0x68] sm:$0xff]
  %v128 = vld [vmem:[%s2 + $0x70] sm:$0xff]
  %v129 = vld [vmem:[%s2 + $0x78] sm:$0xff]
  %v130 = vld [vmem:[%s2 + $0x80] sm:$0xff]
  %v131 = vld [vmem:[%s2 + $0x88] sm:$0xff]
  %v132 = vld [vmem:[%s2 + $0x90] sm:$0xff]
  %v133 = vld [vmem:[%s2 + $0x98] sm:$0xff]
  %v134 = vld [vmem:[%s2 + $0xa0] sm:$0xff]
  %v135 = vld [vmem:[%s2 + $0xa8] sm:$0xff]
  %v136 = vld [vmem:[%s2 + $0xb0] sm:$0xff]
  %v137 = vld [vmem:[%s2 + $0xb8] sm:$0xff]
  %v138 = vld [vmem:[%s2 + $0xc0] sm:$0xff]
  %v139 = vld [vmem:[%s2 + $0xc8] sm:$0xff]
  %v140 = vld [vmem:[%s2 + $0xd0] sm:$0xff]
  %v141 = vld [vmem:[%s2 + $0xd8] sm:$0xff]
  %v142 = vld [vmem:[%s2 + $0xe0] sm:$0xff]
  %v143 = vld [vmem:[%s2 + $0xe8] sm:$0xff]
  %v144 = vld [vmem:[%s2 + $0xf0] sm:$0xff]
  %v145 = vld [vmem:[%s2 + $0xf8] sm:$0xff]
  %v146 = vld [vmem:[%s2 + $0x100] sm:$0xff]
  %v147 = vld [vmem:[%s2 + $0x108] sm:$0xff]
  %v148 = vld [vmem:[%s2 + $0x110] sm:$0xff]
  %v149 = vld [vmem:[%s2 + $0x118] sm:$0xff]
  %v150 = vld [vmem:[%s2 + $0x120] sm:$0xff]
  %v151 = vld [vmem:[%s2 + $0x128] sm:$0xff]
  %v152 = vld [vmem:[%s2 + $0x130] sm:$0xff]
  %v153 = vld [vmem:[%s2 + $0x138] sm:$0xff]
  %v154 = vld [vmem:[%s2 + $0x140] sm:$0xff]
  %v155 = vld [vmem:[%s2 + $0x148] sm:$0xff]
  %v156 = vld [vmem:[%s2 + $0x150] sm:$0xff]
  %v157 = vld [vmem:[%s2 + $0x158] sm:$0xff]
  %v158 = vld [vmem:[%s2 + $0x160] sm:$0xff]
  %v159 = vld [vmem:[%s2 + $0x168] sm:$0xff]
  %v160 = vld [vmem:[%s2 + $0x170] sm:$0xff]
  %v161 = vld [vmem:[%s2 + $0x178] sm:$0xff]
  %v162 = vld [vmem:[%s2 + $0x180] sm:$0x1]
  %v163 = vld [vmem:[%s2 + $0x188] sm:$0x1]
  %vm164 = vcmask 531456
  %v166 = vsel %vm164, %v113, 0
  %v169 = vsel %vm34, %v162, 0
  %v172 = vsel %vm34, %v163, 0
  %174 = vmatprep.subr.mxu0 %v115
  %175 = vmatpush1.msra.mxu0 %v114
  %176 = vmatprep.subr.mxu0 %v117
  %177 = vmatpush1.msra.mxu0 %v116
  %178 = vmatprep.subr.mxu0 %v119
  %179 = vmatpush1.msra.mxu0 %v118
  %180 = vmatprep.subr.mxu0 %v121
  %181 = vmatpush1.msra.mxu0 %v120
  %182 = vmatprep.subr.mxu0 %v123
  %183 = vmatpush1.msra.mxu0 %v122
  %184 = vmatprep.subr.mxu0 %v125
  %185 = vmatpush1.msra.mxu0 %v124
  %186 = vmatprep.subr.mxu0 %v127
  %187 = vmatpush1.msra.mxu0 %v126
  %188 = vmatprep.subr.mxu0 %v129
  %189 = vmatpush1.msra.mxu0 %v128
  %190 = vmatprep.subr.mxu0 %v131
  %191 = vmatpush1.msra.mxu0 %v130
  %192 = vmatprep.subr.mxu0 %v133
  %193 = vmatpush1.msra.mxu0 %v132
  %194 = vmatprep.subr.mxu0 %v135
  %195 = vmatpush1.msra.mxu0 %v134
  %196 = vmatprep.subr.mxu0 %v137
  %197 = vmatpush1.msra.mxu0 %v136
  %198 = vmatprep.subr.mxu0 %v139
  %199 = vmatpush1.msra.mxu0 %v138
  %200 = vmatprep.subr.mxu0 %v141
  %201 = vmatpush1.msra.mxu0 %v140
  %202 = vmatprep.subr.mxu0 %v143
  %203 = vmatpush1.msra.mxu0 %v142
  %204 = vmatprep.subr.mxu0 %v145
  %205 = vmatpush1.msra.mxu0 %v144
  %206 = vmatprep.subr.mxu0 %v147
  %207 = vmatpush1.msra.mxu0 %v146
  %208 = vmatprep.subr.mxu0 %v149
  %209 = vmatpush1.msra.mxu0 %v148
  %210 = vmatprep.subr.mxu0 %v151
  %211 = vmatpush1.msra.mxu0 %v150
  %212 = vmatprep.subr.mxu0 %v153
  %213 = vmatpush1.msra.mxu0 %v152
  %214 = vmatprep.subr.mxu0 %v155
  %215 = vmatpush1.msra.mxu0 %v154
  %216 = vmatprep.subr.mxu0 %v157
  %217 = vmatpush1.msra.mxu0 %v156
  %218 = vmatprep.subr.mxu0 %v159
  %219 = vmatpush1.msra.mxu0 %v158
  %220 = vmatprep.subr.mxu0 %v161
  %221 = vmatpush1.msra.mxu0 %v160
  %222 = vmatprep.subr.mxu0 %v172
  %223 = vmatpush1.msra.mxu0 %v169
  %224 = vmatprep.subr.mxu0 0.0
  %225 = vmatpush1.msra.mxu0 0.0
  %226 = vmatprep.subr.mxu0 0.0
  %227 = vmatpush1.msra.mxu0 0.0
  %228 = vmatprep.subr.mxu0 0.0
  %229 = vmatpush1.msra.mxu0 0.0
  %230 = vmatprep.subr.mxu0 0.0
  %231 = vmatpush1.msra.mxu0 0.0
  %232 = vmatprep.subr.mxu0 0.0
  %233 = vmatpush1.msra.mxu0 0.0
  %234 = vmatprep.subr.mxu0 0.0
  %235 = vmatpush1.msra.mxu0 0.0
  %236 = vmatprep.subr.mxu0 0.0
  %237 = vmatpush1.msra.mxu0 0.0
  %238 = vmatprep.mubr.f32.mxu0 %v166
  %239 = vmatmul.mubr.f32.gmra.mrb[0].mxu0 %v112
  %v240 = vpop.f32.mrb[0].mxu0
  %v241 = vadd.f32 0.0, %v240
  %v242 = vpop.f32.mrb[0].mxu0
  %v243 = vadd.f32 0.0, %v242
  %244 = vdwg.mxu0
  %v245 = vmax.f32 %v241, 0.0
  %v246 = vmax.f32 %v243, 0.0
  %s247 = scalar_lea.vmem %s2, 400
  %v248 = vld [vmem:[%s247] sm:$0xff]
  %v249 = vld [vmem:[%s247 + $0x8] sm:$0xff]
  %v250 = vld [vmem:[%s247 + $0x10] sm:$0xff]
  %v251 = vld [vmem:[%s247 + $0x18] sm:$0xff]
  %v252 = vld [vmem:[%s247 + $0x20] sm:$0xff]
  %v253 = vld [vmem:[%s247 + $0x28] sm:$0xff]
  %v254 = vld [vmem:[%s247 + $0x30] sm:$0xff]
  %v255 = vld [vmem:[%s247 + $0x38] sm:$0xff]
  %v256 = vld [vmem:[%s247 + $0x40] sm:$0xff]
  %v257 = vld [vmem:[%s247 + $0x48] sm:$0xff]
  %v258 = vld [vmem:[%s247 + $0x50] sm:$0xff]
  %v259 = vld [vmem:[%s247 + $0x58] sm:$0xff]
  %v260 = vld [vmem:[%s247 + $0x60] sm:$0xff]
  %v261 = vld [vmem:[%s247 + $0x68] sm:$0xff]
  %v262 = vld [vmem:[%s247 + $0x70] sm:$0xff]
  %v263 = vld [vmem:[%s247 + $0x78] sm:$0xff]
  %v264 = vld [vmem:[%s247 + $0x80] sm:$0xff]
  %v265 = vld [vmem:[%s247 + $0x88] sm:$0xff]
  %v266 = vld [vmem:[%s247 + $0x90] sm:$0xff]
  %v267 = vld [vmem:[%s247 + $0x98] sm:$0xff]
  %v268 = vld [vmem:[%s247 + $0xa0] sm:$0xff]
  %v269 = vld [vmem:[%s247 + $0xa8] sm:$0xff]
  %v270 = vld [vmem:[%s247 + $0xb0] sm:$0xff]
  %v271 = vld [vmem:[%s247 + $0xb8] sm:$0xff]
  %v272 = vld [vmem:[%s247 + $0xc0] sm:$0xff]
  %v273 = vld [vmem:[%s247 + $0xc8] sm:$0xff]
  %v274 = vld [vmem:[%s247 + $0xd0] sm:$0xff]
  %v275 = vld [vmem:[%s247 + $0xd8] sm:$0xff]
  %v276 = vld [vmem:[%s247 + $0xe0] sm:$0xff]
  %v277 = vld [vmem:[%s247 + $0xe8] sm:$0xff]
  %v278 = vld [vmem:[%s247 + $0xf0] sm:$0xff]
  %v279 = vld [vmem:[%s247 + $0xf8] sm:$0xff]
  %v280 = vld [vmem:[%s247 + $0x100] sm:$0xff]
  %v281 = vld [vmem:[%s247 + $0x108] sm:$0xff]
  %v282 = vld [vmem:[%s247 + $0x110] sm:$0xff]
  %v283 = vld [vmem:[%s247 + $0x118] sm:$0xff]
  %v284 = vld [vmem:[%s247 + $0x120] sm:$0xff]
  %v285 = vld [vmem:[%s247 + $0x128] sm:$0xff]
  %v286 = vld [vmem:[%s247 + $0x130] sm:$0xff]
  %v287 = vld [vmem:[%s247 + $0x138] sm:$0xff]
  %v288 = vld [vmem:[%s247 + $0x140] sm:$0xff]
  %v289 = vld [vmem:[%s247 + $0x148] sm:$0xff]
  %v290 = vld [vmem:[%s247 + $0x150] sm:$0xff]
  %v291 = vld [vmem:[%s247 + $0x158] sm:$0xff]
  %v292 = vld [vmem:[%s247 + $0x160] sm:$0xff]
  %v293 = vld [vmem:[%s247 + $0x168] sm:$0xff]
  %v294 = vld [vmem:[%s247 + $0x170] sm:$0xff]
  %v295 = vld [vmem:[%s247 + $0x178] sm:$0xff]
  %v296 = vld [vmem:[%s247 + $0x180] sm:$0x1]
  %v297 = vld [vmem:[%s247 + $0x188] sm:$0x1]
  %v299 = vsel %vm164, %v246, 0
  %v302 = vsel %vm34, %v296, 0
  %v305 = vsel %vm34, %v297, 0
  %307 = vmatprep.subr.mxu0 %v249
  %308 = vmatpush1.msra.mxu0 %v248
  %309 = vmatprep.subr.mxu0 %v251
  %310 = vmatpush1.msra.mxu0 %v250
  %311 = vmatprep.subr.mxu0 %v253
  %312 = vmatpush1.msra.mxu0 %v252
  %313 = vmatprep.subr.mxu0 %v255
  %314 = vmatpush1.msra.mxu0 %v254
  %315 = vmatprep.subr.mxu0 %v257
  %316 = vmatpush1.msra.mxu0 %v256
  %317 = vmatprep.subr.mxu0 %v259
  %318 = vmatpush1.msra.mxu0 %v258
  %319 = vmatprep.subr.mxu0 %v261
  %320 = vmatpush1.msra.mxu0 %v260
  %321 = vmatprep.subr.mxu0 %v263
  %322 = vmatpush1.msra.mxu0 %v262
  %323 = vmatprep.subr.mxu0 %v265
  %324 = vmatpush1.msra.mxu0 %v264
  %325 = vmatprep.subr.mxu0 %v267
  %326 = vmatpush1.msra.mxu0 %v266
  %327 = vmatprep.subr.mxu0 %v269
  %328 = vmatpush1.msra.mxu0 %v268
  %329 = vmatprep.subr.mxu0 %v271
  %330 = vmatpush1.msra.mxu0 %v270
  %331 = vmatprep.subr.mxu0 %v273
  %332 = vmatpush1.msra.mxu0 %v272
  %333 = vmatprep.subr.mxu0 %v275
  %334 = vmatpush1.msra.mxu0 %v274
  %335 = vmatprep.subr.mxu0 %v277
  %336 = vmatpush1.msra.mxu0 %v276
  %337 = vmatprep.subr.mxu0 %v279
  %338 = vmatpush1.msra.mxu0 %v278
  %339 = vmatprep.subr.mxu0 %v281
  %340 = vmatpush1.msra.mxu0 %v280
  %341 = vmatprep.subr.mxu0 %v283
  %342 = vmatpush1.msra.mxu0 %v282
  %343 = vmatprep.subr.mxu0 %v285
  %344 = vmatpush1.msra.mxu0 %v284
  %345 = vmatprep.subr.mxu0 %v287
  %346 = vmatpush1.msra.mxu0 %v286
  %347 = vmatprep.subr.mxu0 %v289
  %348 = vmatpush1.msra.mxu0 %v288
  %349 = vmatprep.subr.mxu0 %v291
  %350 = vmatpush1.msra.mxu0 %v290
  %351 = vmatprep.subr.mxu0 %v293
  %352 = vmatpush1.msra.mxu0 %v292
  %353 = vmatprep.subr.mxu0 %v295
  %354 = vmatpush1.msra.mxu0 %v294
  %355 = vmatprep.subr.mxu0 %v305
  %356 = vmatpush1.msra.mxu0 %v302
  %357 = vmatprep.subr.mxu0 0.0
  %358 = vmatpush1.msra.mxu0 0.0
  %359 = vmatprep.subr.mxu0 0.0
  %360 = vmatpush1.msra.mxu0 0.0
  %361 = vmatprep.subr.mxu0 0.0
  %362 = vmatpush1.msra.mxu0 0.0
  %363 = vmatprep.subr.mxu0 0.0
  %364 = vmatpush1.msra.mxu0 0.0
  %365 = vmatprep.subr.mxu0 0.0
  %366 = vmatpush1.msra.mxu0 0.0
  %367 = vmatprep.subr.mxu0 0.0
  %368 = vmatpush1.msra.mxu0 0.0
  %369 = vmatprep.subr.mxu0 0.0
  %370 = vmatpush1.msra.mxu0 0.0
  %371 = vmatprep.mubr.f32.mxu0 %v299
  %372 = vmatmul.mubr.f32.gmra.mrb[0].mxu0 %v245
  %v373 = vpop.f32.mrb[0].mxu0
  %v374 = vadd.f32 0.0, %v373
  %v375 = vpop.f32.mrb[0].mxu0
  %v376 = vadd.f32 0.0, %v375
  %377 = vdwg.mxu0
  %v378 = vmax.f32 %v374, 0.0
  %v379 = vmax.f32 %v376, 0.0
  %v380 = vld [vmem:[%s3] sm:$0xff]
  %v381 = vld [vmem:[%s3 + $0x8] sm:$0xff]
  %v382 = vld [vmem:[%s3 + $0x10] sm:$0xff]
  %v383 = vld [vmem:[%s3 + $0x18] sm:$0xff]
  %v384 = vld [vmem:[%s3 + $0x20] sm:$0xff]
  %v385 = vld [vmem:[%s3 + $0x28] sm:$0xff]
  %v386 = vld [vmem:[%s3 + $0x30] sm:$0xff]
  %v387 = vld [vmem:[%s3 + $0x38] sm:$0xff]
  %v388 = vld [vmem:[%s3 + $0x40] sm:$0xff]
  %v389 = vld [vmem:[%s3 + $0x48] sm:$0xff]
  %v390 = vld [vmem:[%s3 + $0x50] sm:$0xff]
  %v391 = vld [vmem:[%s3 + $0x58] sm:$0xff]
  %v392 = vld [vmem:[%s3 + $0x60] sm:$0xff]
  %v393 = vld [vmem:[%s3 + $0x68] sm:$0xff]
  %v394 = vld [vmem:[%s3 + $0x70] sm:$0xff]
  %v395 = vld [vmem:[%s3 + $0x78] sm:$0xff]
  %v396 = vld [vmem:[%s3 + $0x80] sm:$0xff]
  %v397 = vld [vmem:[%s3 + $0x88] sm:$0xff]
  %v398 = vld [vmem:[%s3 + $0x90] sm:$0xff]
  %v399 = vld [vmem:[%s3 + $0x98] sm:$0xff]
  %v400 = vld [vmem:[%s3 + $0xa0] sm:$0xff]
  %v401 = vld [vmem:[%s3 + $0xa8] sm:$0xff]
  %v402 = vld [vmem:[%s3 + $0xb0] sm:$0xff]
  %v403 = vld [vmem:[%s3 + $0xb8] sm:$0xff]
  %v404 = vld [vmem:[%s3 + $0xc0] sm:$0x1]
  %v406 = vsel %vm164, %v379, 0
  %v409 = vsel %vm34, %v404, 0
  %411 = vmatprep.subr.mxu0 0.0
  %412 = vmatpush1.msra.mxu0 %v380
  %413 = vmatprep.subr.mxu0 0.0
  %414 = vmatpush1.msra.mxu0 %v381
  %415 = vmatprep.subr.mxu0 0.0
  %416 = vmatpush1.msra.mxu0 %v382
  %417 = vmatprep.subr.mxu0 0.0
  %418 = vmatpush1.msra.mxu0 %v383
  %419 = vmatprep.subr.mxu0 0.0
  %420 = vmatpush1.msra.mxu0 %v384
  %421 = vmatprep.subr.mxu0 0.0
  %422 = vmatpush1.msra.mxu0 %v385
  %423 = vmatprep.subr.mxu0 0.0
  %424 = vmatpush1.msra.mxu0 %v386
  %425 = vmatprep.subr.mxu0 0.0
  %426 = vmatpush1.msra.mxu0 %v387
  %427 = vmatprep.subr.mxu0 0.0
  %428 = vmatpush1.msra.mxu0 %v388
  %429 = vmatprep.subr.mxu0 0.0
  %430 = vmatpush1.msra.mxu0 %v389
  %431 = vmatprep.subr.mxu0 0.0
  %432 = vmatpush1.msra.mxu0 %v390
  %433 = vmatprep.subr.mxu0 0.0
  %434 = vmatpush1.msra.mxu0 %v391
  %435 = vmatprep.subr.mxu0 0.0
  %436 = vmatpush1.msra.mxu0 %v392
  %437 = vmatprep.subr.mxu0 0.0
  %438 = vmatpush1.msra.mxu0 %v393
  %439 = vmatprep.subr.mxu0 0.0
  %440 = vmatpush1.msra.mxu0 %v394
  %441 = vmatprep.subr.mxu0 0.0
  %442 = vmatpush1.msra.mxu0 %v395
  %443 = vmatprep.subr.mxu0 0.0
  %444 = vmatpush1.msra.mxu0 %v396
  %445 = vmatprep.subr.mxu0 0.0
  %446 = vmatpush1.msra.mxu0 %v397
  %447 = vmatprep.subr.mxu0 0.0
  %448 = vmatpush1.msra.mxu0 %v398
  %449 = vmatprep.subr.mxu0 0.0
  %450 = vmatpush1.msra.mxu0 %v399
  %451 = vmatprep.subr.mxu0 0.0
  %452 = vmatpush1.msra.mxu0 %v400
  %453 = vmatprep.subr.mxu0 0.0
  %454 = vmatpush1.msra.mxu0 %v401
  %455 = vmatprep.subr.mxu0 0.0
  %456 = vmatpush1.msra.mxu0 %v402
  %457 = vmatprep.subr.mxu0 0.0
  %458 = vmatpush1.msra.mxu0 %v403
  %459 = vmatprep.subr.mxu0 0.0
  %460 = vmatpush1.msra.mxu0 %v409
  %461 = vmatprep.subr.mxu0 0.0
  %462 = vmatpush1.msra.mxu0 0.0
  %463 = vmatprep.subr.mxu0 0.0
  %464 = vmatpush1.msra.mxu0 0.0
  %465 = vmatprep.subr.mxu0 0.0
  %466 = vmatpush1.msra.mxu0 0.0
  %467 = vmatprep.subr.mxu0 0.0
  %468 = vmatpush1.msra.mxu0 0.0
  %469 = vmatprep.subr.mxu0 0.0
  %470 = vmatpush1.msra.mxu0 0.0
  %471 = vmatprep.subr.mxu0 0.0
  %472 = vmatpush1.msra.mxu0 0.0
  %473 = vmatprep.subr.mxu0 0.0
  %474 = vmatpush1.msra.mxu0 0.0
  %475 = vmatprep.mubr.f32.mxu0 %v406
  %476 = vmatmul.mubr.f32.gmra.mrb[0].mxu0 %v378
  %v477 = vpop.f32.mrb[0].mxu0
  %v478 = vadd.f32 0.0, %v477
  %v479 = vpop.f32.mrb[0].mxu0
  %480 = vdwg.mxu0
  %v481 = vmax.f32 %v478, 0.0
  %v482 = vld [vmem:[%s4] sm:$0xff]
  %v483 = vld [vmem:[%s4 + $0x8] sm:$0xff]
  %v484 = vld [vmem:[%s4 + $0x10] sm:$0xff]
  %v485 = vld [vmem:[%s4 + $0x18] sm:$0xff]
  %v486 = vld [vmem:[%s4 + $0x20] sm:$0xff]
  %v487 = vld [vmem:[%s4 + $0x28] sm:$0xff]
  %v488 = vld [vmem:[%s4 + $0x30] sm:$0x1]
  %vm489 = vcmask 400384
  %v491 = vsel %vm489, %v481, 0
  %v494 = vsel %vm34, %v488, 0
  %496 = vmatprep.subr.mxu0 0.0
  %497 = vmatpush1.msra.mxu0 %v482
  %498 = vmatprep.subr.mxu0 0.0
  %499 = vmatpush1.msra.mxu0 %v483
  %500 = vmatprep.subr.mxu0 0.0
  %501 = vmatpush1.msra.mxu0 %v484
  %502 = vmatprep.subr.mxu0 0.0
  %503 = vmatpush1.msra.mxu0 %v485
  %504 = vmatprep.subr.mxu0 0.0
  %505 = vmatpush1.msra.mxu0 %v486
  %506 = vmatprep.subr.mxu0 0.0
  %507 = vmatpush1.msra.mxu0 %v487
  %508 = vmatprep.subr.mxu0 0.0
  %509 = vmatpush1.msra.mxu0 %v494
  %510 = vmatprep.subr.mxu0 0.0
  %511 = vmatpush1.msra.mxu0 0.0
  %512 = vmatprep.subr.mxu0 0.0
  %513 = vmatpush1.msra.mxu0 0.0
  %514 = vmatprep.subr.mxu0 0.0
  %515 = vmatpush1.msra.mxu0 0.0
  %516 = vmatprep.subr.mxu0 0.0
  %517 = vmatpush1.msra.mxu0 0.0
  %518 = vmatprep.subr.mxu0 0.0
  %519 = vmatpush1.msra.mxu0 0.0
  %520 = vmatprep.subr.mxu0 0.0
  %521 = vmatpush1.msra.mxu0 0.0
  %522 = vmatprep.subr.mxu0 0.0
  %523 = vmatpush1.msra.mxu0 0.0
  %524 = vmatprep.subr.mxu0 0.0
  %525 = vmatpush1.msra.mxu0 0.0
  %526 = vmatprep.subr.mxu0 0.0
  %527 = vmatpush1.msra.mxu0 0.0
  %528 = vmatprep.subr.mxu0 0.0
  %529 = vmatpush1.msra.mxu0 0.0
  %530 = vmatprep.subr.mxu0 0.0
  %531 = vmatpush1.msra.mxu0 0.0
  %532 = vmatprep.subr.mxu0 0.0
  %533 = vmatpush1.msra.mxu0 0.0
  %534 = vmatprep.subr.mxu0 0.0
  %535 = vmatpush1.msra.mxu0 0.0
  %536 = vmatprep.subr.mxu0 0.0
  %537 = vmatpush1.msra.mxu0 0.0
  %538 = vmatprep.subr.mxu0 0.0
  %539 = vmatpush1.msra.mxu0 0.0
  %540 = vmatprep.subr.mxu0 0.0
  %541 = vmatpush1.msra.mxu0 0.0
  %542 = vmatprep.subr.mxu0 0.0
  %543 = vmatpush1.msra.mxu0 0.0
  %544 = vmatprep.subr.mxu0 0.0
  %545 = vmatpush1.msra.mxu0 0.0
  %546 = vmatprep.subr.mxu0 0.0
  %547 = vmatpush1.msra.mxu0 0.0
  %548 = vmatprep.subr.mxu0 0.0
  %549 = vmatpush1.msra.mxu0 0.0
  %550 = vmatprep.subr.mxu0 0.0
  %551 = vmatpush1.msra.mxu0 0.0
  %552 = vmatprep.subr.mxu0 0.0
  %553 = vmatpush1.msra.mxu0 0.0
  %554 = vmatprep.subr.mxu0 0.0
  %555 = vmatpush1.msra.mxu0 0.0
  %556 = vmatprep.subr.mxu0 0.0
  %557 = vmatpush1.msra.mxu0 0.0
  %558 = vmatprep.subr.mxu0 0.0
  %559 = vmatpush1.msra.mxu0 0.0
  %560 = vmatprep.mubr.f32.mxu0 0.0
  %561 = vmatmul.mubr.f32.gmra.mrb[0].mxu0 %v491
  %v562 = vpop.f32.mrb[0].mxu0
  %v563 = vadd.f32 0.0, %v562
  %v564 = vpop.f32.mrb[0].mxu0
  %565 = vdwg.mxu0
  %v566 = vmax.f32 %v563, 0.0
  %v567 = vld [vmem:[%s5] sm:$0x7]
  %vm568 = vcmask 23552
  %v570 = vsel %vm568, %v566, 0
  %vm572 = vcmask 1042432
  %v574 = vsel %vm572, %v567, 0
  %576 = vmatprep.subr.mxu0 0.0
  %577 = vmatpush1.msra.mxu0 %v574
  %578 = vmatprep.subr.mxu0 0.0
  %579 = vmatpush1.msra.mxu0 0.0
  %580 = vmatprep.subr.mxu0 0.0
  %581 = vmatpush1.msra.mxu0 0.0
  %582 = vmatprep.subr.mxu0 0.0
  %583 = vmatpush1.msra.mxu0 0.0
  %584 = vmatprep.subr.mxu0 0.0
  %585 = vmatpush1.msra.mxu0 0.0
  %586 = vmatprep.subr.mxu0 0.0
  %587 = vmatpush1.msra.mxu0 0.0
  %588 = vmatprep.subr.mxu0 0.0
  %589 = vmatpush1.msra.mxu0 0.0
  %590 = vmatprep.subr.mxu0 0.0
  %591 = vmatpush1.msra.mxu0 0.0
  %592 = vmatprep.subr.mxu0 0.0
  %593 = vmatpush1.msra.mxu0 0.0
  %594 = vmatprep.subr.mxu0 0.0
  %595 = vmatpush1.msra.mxu0 0.0
  %596 = vmatprep.subr.mxu0 0.0
  %597 = vmatpush1.msra.mxu0 0.0
  %598 = vmatprep.subr.mxu0 0.0
  %599 = vmatpush1.msra.mxu0 0.0
  %600 = vmatprep.subr.mxu0 0.0
  %601 = vmatpush1.msra.mxu0 0.0
  %602 = vmatprep.subr.mxu0 0.0
  %603 = vmatpush1.msra.mxu0 0.0
  %604 = vmatprep.subr.mxu0 0.0
  %605 = vmatpush1.msra.mxu0 0.0
  %606 = vmatprep.subr.mxu0 0.0
  %607 = vmatpush1.msra.mxu0 0.0
  %608 = vmatprep.subr.mxu0 0.0
  %609 = vmatpush1.msra.mxu0 0.0
  %610 = vmatprep.subr.mxu0 0.0
  %611 = vmatpush1.msra.mxu0 0.0
  %612 = vmatprep.subr.mxu0 0.0
  %613 = vmatpush1.msra.mxu0 0.0
  %614 = vmatprep.subr.mxu0 0.0
  %615 = vmatpush1.msra.mxu0 0.0
  %616 = vmatprep.subr.mxu0 0.0
  %617 = vmatpush1.msra.mxu0 0.0
  %618 = vmatprep.subr.mxu0 0.0
  %619 = vmatpush1.msra.mxu0 0.0
  %620 = vmatprep.subr.mxu0 0.0
  %621 = vmatpush1.msra.mxu0 0.0
  %622 = vmatprep.subr.mxu0 0.0
  %623 = vmatpush1.msra.mxu0 0.0
  %624 = vmatprep.subr.mxu0 0.0
  %625 = vmatpush1.msra.mxu0 0.0
  %626 = vmatprep.subr.mxu0 0.0
  %627 = vmatpush1.msra.mxu0 0.0
  %628 = vmatprep.subr.mxu0 0.0
  %629 = vmatpush1.msra.mxu0 0.0
  %630 = vmatprep.subr.mxu0 0.0
  %631 = vmatpush1.msra.mxu0 0.0
  %632 = vmatprep.subr.mxu0 0.0
  %633 = vmatpush1.msra.mxu0 0.0
  %634 = vmatprep.subr.mxu0 0.0
  %635 = vmatpush1.msra.mxu0 0.0
  %636 = vmatprep.subr.mxu0 0.0
  %637 = vmatpush1.msra.mxu0 0.0
  %638 = vmatprep.subr.mxu0 0.0
  %639 = vmatpush1.msra.mxu0 0.0
  %640 = vmatprep.mubr.f32.mxu0 0.0
  %641 = vmatmul.mubr.f32.gmra.mrb[0].mxu0 %v570
  %v642 = vpop.f32.mrb[0].mxu0
  %v643 = vadd.f32 0.0, %v642
  %v644 = vpop.f32.mrb[0].mxu0
  %645 = vdwg.mxu0
  %vm646 = vcmask 386048
  %647 = vst.msk [vmem:[%s6] sm:$0x3] %vm646, %v643
  // Predicated region
  $region26: #{decomposer_time_locked_forward.1} parent=0 // pred_check
    _
  $region27: #{decomposer_time_locked_forward.1} parent=0 // pred_check_branch
    %649 = sbr.rel (0) target = $region29
  $region28: #{decomposer_time_locked_forward.1} parent=0 // pred_region
    _
  $region29: #{decomposer_time_locked_forward.1} parent=0 // pred_fallthru
    _
  // Predicated region
  $region30: #{decomposer_time_locked_forward.1} parent=0 // pred_check
    _
  $region31: #{decomposer_time_locked_forward.1} parent=0 // pred_check_branch
    %651 = sbr.rel (0) target = $region33
  $region32: #{decomposer_time_locked_forward.1} parent=0 // pred_region
    _
  $region33: #{decomposer_time_locked_forward.1} parent=0 // pred_fallthru
    _

</llo_original>
